<compile_context>
chip_gen: v7x
topology: tpu7x:2x2x1
jax: 0.10.0
libtpu: 0.0.40
codegen_flags: <defaults>
</compile_context>

<pallas_src>
import math

import jax
import jax.numpy as jnp
from jax.experimental import pallas as pl
from jax.experimental.pallas import tpu as pltpu

LANES = 128          # vreg lane width
MAX_TILE_ROWS = 512  # 512x128 f32 = 256 KiB/buffer; ~85% HBM roofline on v6e


def _pc_regressor_kernel(x_ref, scale_ref, shift_ref, o_ref):
    # scale = w * 1.877537, shift = b * 1.877537 + 4.92487 (folded in wrapper)
    scale = scale_ref[0]
    shift = shift_ref[0]
    z = x_ref[...] * scale + shift
    sig = 1.0 / (1.0 + jnp.exp(-z))          # nn.Sigmoid()
    o_ref[...] = sig * jnp.float32(8.2) + jnp.float32(0.9)


def pc_regressor_forward(x, w, b):
    """x: (B, 1) f32; w: (1, 1) f32 (Linear weight); b: (1,) f32 (Linear bias)."""
    assert x.ndim == 2 and x.shape[-1] == 1
    B = x.shape[0]
    x = x.astype(jnp.float32)

    # Fold the Linear + first affine into one scale/shift pair (SMEM scalars).
    w_s = jnp.asarray(w, jnp.float32).reshape(())
    b_s = jnp.asarray(b, jnp.float32).reshape(())
    scale = (w_s * jnp.float32(1.877537)).reshape((1,))
    shift = (b_s * jnp.float32(1.877537) + jnp.float32(4.92487)).reshape((1,))

    # --- lane-dense layout plumbing: (B,1) -> padded (rows_p, 128) slab ---
    rows = max(1, math.ceil(B / LANES))
    rows_p = ((rows + 7) // 8) * 8                       # sublane multiple of 8
    tile_rows = min(MAX_TILE_ROWS, rows_p)
    rows_p = ((rows_p + tile_rows - 1) // tile_rows) * tile_rows
    total = rows_p * LANES

    flat = x.reshape((B,))
    pad = total - B
    if pad:
        flat = jnp.pad(flat, (0, pad))                   # padded lanes sliced off later
    x2d = flat.reshape((rows_p, LANES))

    grid = (rows_p // tile_rows,)
    out2d = pl.pallas_call(
        _pc_regressor_kernel,
        out_shape=jax.ShapeDtypeStruct((rows_p, LANES), jnp.float32),
        grid=grid,
        in_specs=[
            pl.BlockSpec((tile_rows, LANES), lambda i: (i, 0)),  # x tile (VMEM)
            pl.BlockSpec(memory_space=pltpu.SMEM),               # scale scalar
            pl.BlockSpec(memory_space=pltpu.SMEM),               # shift scalar
        ],
        out_specs=pl.BlockSpec((tile_rows, LANES), lambda i: (i, 0)),
        compiler_params=pltpu.CompilerParams(
            dimension_semantics=("parallel",),           # shard across v7x's 2 TCs
        ),
    )(x2d, scale, shift)

    # Slice padding back off and restore the (B, 1) layout.
    return out2d.reshape((-1,))[:B].reshape((B, 1))


def _reference(x, w, b):
    return jax.nn.sigmoid((x @ w.T + b) * 1.877537 + 4.92487) * 8.2 + 0.9


if __name__ == "__main__":
    key = jax.random.PRNGKey(0)
    kx, kw, kb, kx2 = jax.random.split(key, 4)

    # Deterministic Linear(1,1)-style params.
    w = jax.random.uniform(kw, (1, 1), minval=-1.0, maxval=1.0, dtype=jnp.float32)
    b = jax.random.uniform(kb, (1,), minval=-1.0, maxval=1.0, dtype=jnp.float32)

    # Small batch, matching the module's (B, 1) input.
    B = 8
    x = jax.random.normal(kx, (B, 1), dtype=jnp.float32)
    out = jax.block_until_ready(pc_regressor_forward(x, w, b))
    ref = _reference(x, w, b)
    assert out.shape == (B, 1)
    assert jnp.allclose(out, ref, atol=1e-5, rtol=1e-5)

    # Larger batch: exercises padding + multi-step grid (2 tiles of 512x128).
    B2 = 70_000
    x2 = jax.random.normal(kx2, (B2, 1), dtype=jnp.float32)
    out2 = jax.block_until_ready(pc_regressor_forward(x2, w, b))
    ref2 = _reference(x2, w, b)
    assert out2.shape == (B2, 1)
    assert jnp.allclose(out2, ref2, atol=1e-5, rtol=1e-5)

    print("KERNEL_OK")
</pallas_src>

<mosaic_0001>
module attributes {stable_mosaic.version = 11 : i64} {
  func.func @_pc_regressor_kernel(%arg0: i32, %arg1: memref<8x128xf32, #tpu.memory_space<vmem>>, %arg2: memref<1xf32, #tpu.memory_space<smem>>, %arg3: memref<1xf32, #tpu.memory_space<smem>>, %arg4: memref<8x128xf32, #tpu.memory_space<vmem>>) attributes {dimension_semantics = [#tpu.dimension_semantics<parallel>], iteration_bounds = array<i64: 1>, scalar_prefetch = 0 : i64, scratch_operands = 0 : i64, tpu.core_type = #tpu.core_type<tc>, window_params = [{transform_indices = @transform_0, window_bounds = array<i64: 8, 128>}, {transform_indices = @transform_1, window_bounds = array<i64: 1>}, {transform_indices = @transform_2, window_bounds = array<i64: 1>}, {transform_indices = @transform_3, window_bounds = array<i64: 8, 128>}]} {
    %c0 = arith.constant 0 : index
    %0 = memref.load %arg2[%c0] : memref<1xf32, #tpu.memory_space<smem>>
    %c0_0 = arith.constant 0 : index
    %1 = memref.load %arg3[%c0_0] : memref<1xf32, #tpu.memory_space<smem>>
    %c0_1 = arith.constant 0 : index
    %c0_2 = arith.constant 0 : index
    %2 = vector.load %arg1[%c0_1, %c0_2] : memref<8x128xf32, #tpu.memory_space<vmem>>, vector<8x128xf32>
    %3 = vector.broadcast %0 : f32 to vector<8x128xf32>
    %4 = arith.mulf %2, %3 : vector<8x128xf32>
    %5 = vector.broadcast %1 : f32 to vector<8x128xf32>
    %6 = arith.addf %4, %5 : vector<8x128xf32>
    %cst = arith.constant 0.000000e+00 : f32
    %7 = vector.broadcast %cst : f32 to vector<8x128xf32>
    %8 = arith.subf %7, %6 : vector<8x128xf32>
    %9 = math.exp %8 : vector<8x128xf32>
    %cst_3 = arith.constant 1.000000e+00 : f32
    %10 = vector.broadcast %cst_3 : f32 to vector<8x128xf32>
    %11 = arith.addf %10, %9 : vector<8x128xf32>
    %cst_4 = arith.constant 1.000000e+00 : f32
    %12 = vector.broadcast %cst_4 : f32 to vector<8x128xf32>
    %13 = arith.divf %12, %11 : vector<8x128xf32>
    %cst_5 = arith.constant 8.1999998 : f32
    %14 = vector.broadcast %cst_5 : f32 to vector<8x128xf32>
    %15 = arith.mulf %13, %14 : vector<8x128xf32>
    %cst_6 = arith.constant 0.899999976 : f32
    %16 = vector.broadcast %cst_6 : f32 to vector<8x128xf32>
    %17 = arith.addf %15, %16 : vector<8x128xf32>
    %c0_7 = arith.constant 0 : index
    %c0_8 = arith.constant 0 : index
    %18 = vector.load %arg4[%c0_7, %c0_8] : memref<8x128xf32, #tpu.memory_space<vmem>>, vector<8x128xf32>
    tpu.vector_store %arg4[%c0_7, %c0_8], %17 {strides = array<i32>} : memref<8x128xf32, #tpu.memory_space<vmem>>, vector<8x128xf32>,
    return
  }
  func.func @transform_0(%arg0: i32) -> (i32, i32) {
    %c0_i32 = arith.constant 0 : i32
    %c0_i32_0 = arith.constant 0 : i32
    return %arg0, %c0_i32 : i32, i32
  }
  func.func @transform_1(%arg0: i32) -> i32 {
    %c0_i32 = arith.constant 0 : i32
    %c0_i32_0 = arith.constant 0 : i32
    return %c0_i32 : i32
  }
  func.func @transform_2(%arg0: i32) -> i32 {
    %c0_i32 = arith.constant 0 : i32
    %c0_i32_0 = arith.constant 0 : i32
    return %c0_i32 : i32
  }
  func.func @transform_3(%arg0: i32) -> (i32, i32) {
    %c0_i32 = arith.constant 0 : i32
    %c0_i32_0 = arith.constant 0 : i32
    return %arg0, %c0_i32 : i32, i32
  }
}

</mosaic_0001>

<llo_original>
// kernel: tpu_custom_call.1
$region0: #{tpu_custom_call.1}
  #allocation0 [shape = 'u32[]', space=smem, size = 0x4, offset = 0x4, fixed_abs, tag = 'smem constant byte address 0x4 - core index']
  #allocation1 [shape = 'u32[144,128]{1,0:T(1,128)}', space=vmem, size = 0x12000, scoped, tag = 'internal scratch']
  #allocation2 [shape = 'f32[1]{0:T(128)S(6)}', space=smem, size = 0x200, scoped, tag = 'scoped memory for tpu_custom_call.1']
  #allocation3 [shape = 'f32[1]{0:T(128)S(6)}', space=smem, size = 0x200, scoped, tag = 'scoped memory for tpu_custom_call.1']
  %s0 = inlined_call_operand.hbm [shape: f32[8,128], index: 0, kind: input, shape index: {}]
  %s1 = inlined_call_operand.<no memory space> [shape: f32[1], index: 1, kind: input, shape index: {}]
  %s2 = inlined_call_operand.<no memory space> [shape: f32[1], index: 2, kind: input, shape index: {}]
  %s3 = inlined_call_operand.hbm [shape: f32[8,128], index: 3, kind: output, shape index: {}]
  %s4 = sld [smem:[#allocation0]]
  $region26: #{tpu_custom_call.1} parent=0
    _
  %s6 = ssub.s32 1, %s4
  %s7 = scalar_select 0, %s6, %s4
  %8 = sst [smem:[#allocation2]] %s1
  %9 = sst [smem:[#allocation3]] %s2
  $region1: #{tpu_custom_call.1} parent=0
    #allocation4 [shape = 'u8[4096]{0}', space=vmem, size = 0x1000, scoped, tag = 'input window, operand 0, single buffered']
    #allocation5 [shape = 's32[1]{0}', space=sflag, size = 0x4, scoped, tag = 'scoped memory for tpu_custom_call.1']
    #allocation6 [shape = 's32[1]{0}', space=sflag, size = 0x4, scoped, tag = 'scoped memory for tpu_custom_call.1']
    #allocation7 [shape = 'u8[4096]{0}', space=vmem, size = 0x1000, scoped, tag = 'output window, operand 0, single buffered']
    %10 = vsyncpa [#allocation5], 0
    %11 = vsyncpa [#allocation6], 0
    // Predicated region
    $region2: #{tpu_custom_call.1} parent=1 // pred_check
      _
    $region3: #{tpu_custom_call.1} parent=1 // pred_check_branch
      %13 = sbr.rel (0) target = $region5
    $region4: #{tpu_custom_call.1} parent=1 // pred_region
      %s15 = ssub.s32 128, 128
      %16 = vsyncadd [#allocation5], %s15
      %s18 = sshll.u32 [#allocation4], 4
      %s19 = int_to_ptr.vmem [resolvable:$true] %s18
      %21 = dma.hbm_to_vmem [thread:$0]  %s0, 128, %s19, [#allocation5]
    $region5: #{tpu_custom_call.1} parent=1 // pred_fallthru
      _
    // Predicated region
    $region6: #{tpu_custom_call.1} parent=1 // pred_check
      _
    $region7: #{tpu_custom_call.1} parent=1 // pred_check_branch
      %23 = sbr.rel (0) target = $region9
    $region8: #{tpu_custom_call.1} parent=1 // pred_region
      _
    $region9: #{tpu_custom_call.1} parent=1 // pred_fallthru
      _
    // Predicated region
    $region10: #{tpu_custom_call.1} parent=1 // pred_check
      _
    $region11: #{tpu_custom_call.1} parent=1 // pred_check_branch
      %25 = sbr.rel (0) target = $region13
    $region12: #{tpu_custom_call.1} parent=1 // pred_region
      _
    $region13: #{tpu_custom_call.1} parent=1 // pred_fallthru
      _
    // Predicated region
    $region14: #{tpu_custom_call.1} parent=1 // pred_check
      _
    $region15: #{tpu_custom_call.1} parent=1 // pred_check_branch
      %27 = sbr.rel (0) target = $region17
    $region16: #{tpu_custom_call.1} parent=1 // pred_region
      %28 = dma.done [#allocation5], 128
    $region17: #{tpu_custom_call.1} parent=1 // pred_fallthru
      _
    %s29 = sld [smem:[#allocation2]]
    %s30 = sld [smem:[#allocation3]]
    %v31 = vld [vmem:[#allocation4] sm:$0xff]
    %v32 = vstv %s29
    %v33 = vmul.f32 %v31, %v32
    %v34 = vstv %s30
    %v35 = vadd.f32 %v33, %v34
    %v36 = vsub.f32 0.0, %v35
    %v37 = vmul.f32 %v36, 1.442695
    %v38 = vpow.pop %v37
    %v39 = vadd.f32 %v38, 1.0
    %v40 = vrcp.pop %v39
    %v41 = vmul.f32 1.0, %v40
    %v42 = vmul.f32 %v41, 8.2
    %v43 = vadd.f32 %v42, 0.9
    %44 = vst [vmem:[#allocation7] sm:$0xff] %v43
    // Predicated region
    $region18: #{tpu_custom_call.1} parent=1 // pred_check
      _
    $region19: #{tpu_custom_call.1} parent=1 // pred_check_branch
      %46 = sbr.rel (0) target = $region21
    $region20: #{tpu_custom_call.1} parent=1 // pred_region
      %s48 = ssub.s32 128, 128
      %49 = vsyncadd [#allocation6], %s48
      %s51 = sshll.u32 [#allocation7], 4
      %s52 = int_to_ptr.vmem [resolvable:$true] %s51
      %54 = dma.vmem_to_hbm [thread:$0]  %s52, 128, %s3, [#allocation6]
    $region21: #{tpu_custom_call.1} parent=1 // pred_fallthru
      _
    // Predicated region
    $region22: #{tpu_custom_call.1} parent=1 // pred_check
      _
    $region23: #{tpu_custom_call.1} parent=1 // pred_check_branch
      %56 = sbr.rel (0) target = $region25
    $region24: #{tpu_custom_call.1} parent=1 // pred_region
      %57 = dma.done [#allocation6], 128
    $region25: #{tpu_custom_call.1} parent=1 // pred_fallthru
      _
    %58 = vsyncpa [#allocation5], 1
    %59 = vsyncpa [#allocation6], 1

</llo_original>
